<compile_context>
chip_gen: v7x
topology: tpu7x:2x2x1
jax: 0.10.0
libtpu: 0.0.40
codegen_flags: <defaults>
</compile_context>

<pallas_src>
import functools

import jax
import jax.numpy as jnp
from jax.experimental import pallas as pl
from jax.experimental.pallas import tpu as pltpu


def _round_up(n: int, m: int) -> int:
    return ((n + m - 1) // m) * m


def _cdiv(a: int, b: int) -> int:
    return -(-a // b)


def _vmem_block_target_bytes() -> int:
    """Per-generation corner-block budget.

    Double-buffered x-in + out blocks cost ~4x the block, plus the (tiny)
    prompt slab; keep that under the default scoped VMEM limit:
      v5e: 16 MiB scoped  -> ~3 MiB blocks (~12 MiB pipeline footprint)
      v6e: 32 MiB scoped  -> ~6 MiB blocks
      v7x: 32 MiB scoped (64 MiB physical) -> ~6 MiB blocks
    """
    try:
        kind = jax.devices()[0].device_kind.lower()
    except Exception:  # pragma: no cover - defensive
        kind = ""
    if "v5" in kind:
        return 3 << 20
    return 6 << 20


def _pick_batch_tile(batch: int, per_image_bytes: int, target_bytes: int) -> int:
    """Pick the batch tile (need not divide `batch`; last block is ragged).

    Largest tile under the VMEM budget, then nudge the step count to be even
    (and >= 2 when batch > 1) so v7x can split the "parallel" batch axis
    evenly across its two TensorCores.
    """
    per_image_bytes = max(per_image_bytes, 1)
    bt = max(1, min(batch, target_bytes // per_image_bytes))
    steps = _cdiv(batch, bt)
    if batch > 1:
        if steps < 2:
            steps = 2
        if steps % 2 == 1:
            steps += 1
        bt = max(1, _cdiv(batch, steps))
    return bt


def _prompter_kernel(x_ref, prompt_ref, o_ref):
    # x_ref / o_ref: (bt, C, rows, cols) corner slab; prompt_ref: (1, C, rows, cols).
    # Single unmasked full-block add + store (broadcast over the batch dim).
    # No MXU / loops needed: the kernel is DMA-bound, VPU has huge slack.
    o_ref[...] = x_ref[...] + prompt_ref[...]


@functools.partial(jax.jit, donate_argnums=(0,))
def fixed_patch_prompter(x, patch):
    """x: (B, C, H, W), patch: (1, C, psize, psize) -> x + zero-padded patch.

    x is donated: the output aliases x and only the top-left corner slab is
    read / modified / written. (If a caller does not donate, XLA inserts one
    copy of x around the aliased call; output is still correct.)
    """
    B, C, H, W = x.shape
    psize = patch.shape[-1]
    itemsize = jnp.dtype(x.dtype).itemsize

    # Sublane (second-minor) extent: dtype-aware packing (8 rows/vreg for f32,
    # 16 for bf16, 32 for int8/fp8), clamped to the full height.
    sublane = {4: 8, 2: 16, 1: 32}.get(itemsize, 8)
    rows = min(_round_up(psize, sublane), H)

    # Lane (minor) extent: multiple of 128, or the full width when psize is
    # close to W.  Only these columns are touched / moved over HBM.
    cols = _round_up(psize, 128)
    if cols >= W:
        cols = W

    # Zero-padded prompt slab (tiny: C * rows * cols elements), DMA'd once.
    pr, pc = min(psize, rows), min(psize, cols)
    prompt = jnp.zeros((1, C, rows, cols), dtype=x.dtype)
    prompt = prompt.at[:, :, :pr, :pc].set(patch[:, :, :pr, :pc].astype(x.dtype))

    per_image_bytes = C * rows * cols * itemsize
    bt = _pick_batch_tile(B, per_image_bytes, _vmem_block_target_bytes())
    grid = (pl.cdiv(B, bt),)

    slab_bytes = per_image_bytes
    cost = pl.CostEstimate(
        flops=B * C * rows * cols,
        transcendentals=0,
        bytes_accessed=(2 * B + 1) * slab_bytes,  # read+write corners, read prompt
    )

    return pl.pallas_call(
        _prompter_kernel,
        out_shape=jax.ShapeDtypeStruct((B, C, H, W), x.dtype),
        grid=grid,
        in_specs=[
            # Corner slab of bt images per grid step (last block may be ragged).
            pl.BlockSpec((bt, C, rows, cols), lambda b: (b, 0, 0, 0)),
            # Shared prompt slab: constant index_map -> fetched once, reused.
            pl.BlockSpec((1, C, rows, cols), lambda b: (0, 0, 0, 0)),
        ],
        out_specs=pl.BlockSpec((bt, C, rows, cols), lambda b: (b, 0, 0, 0)),
        # Output aliases x: untouched pixels never move over HBM.
        input_output_aliases={0: 0},
        compiler_params=pltpu.CompilerParams(
            dimension_semantics=("parallel",),
        ),
        cost_estimate=cost,
    )(x, prompt)


if __name__ == "__main__":
    # Small shapes consistent with the module: C=3 is fixed by the parameter.
    B, C, isize, psize = 2, 3, 16, 4

    key = jax.random.PRNGKey(0)
    kx, kp = jax.random.split(key)
    x = jax.random.normal(kx, (B, C, isize, isize), dtype=jnp.float32)
    # Deterministic "randn" init of the patch parameter (module __init__).
    patch = jax.random.normal(kp, (1, C, psize, psize), dtype=jnp.float32)

    # Pure-JAX reference (mirrors the PyTorch forward), computed BEFORE the
    # kernel call because x is donated to the kernel.
    prompt_full = jnp.zeros((1, C, isize, isize), dtype=jnp.float32)
    prompt_full = prompt_full.at[:, :, :psize, :psize].set(patch)
    ref = jax.block_until_ready(x + prompt_full)

    out = jax.block_until_ready(fixed_patch_prompter(x, patch))

    assert out.shape == (B, C, isize, isize)
    assert out.dtype == jnp.float32
    assert jnp.allclose(out, ref, atol=1e-6), "mismatch vs reference"
    print("KERNEL_OK")
</pallas_src>

<mosaic_0001>
module attributes {stable_mosaic.version = 11 : i64} {
  func.func @_prompter_kernel(%arg0: i32, %arg1: memref<1x3x8x16xf32, #tpu.memory_space<vmem>>, %arg2: memref<1x3x8x16xf32, #tpu.memory_space<vmem>>, %arg3: memref<1x3x8x16xf32, #tpu.memory_space<vmem>>) attributes {dimension_semantics = [#tpu.dimension_semantics<parallel>], iteration_bounds = array<i64: 2>, scalar_prefetch = 0 : i64, scratch_operands = 0 : i64, tpu.core_type = #tpu.core_type<tc>, window_params = [{transform_indices = @transform_0, window_bounds = array<i64: 1, 3, 8, 16>}, {pipeline_mode = #tpu.pipeline_mode<synchronous>, transform_indices = @transform_1, window_bounds = array<i64: 1, 3, 8, 16>}, {transform_indices = @transform_2, window_bounds = array<i64: 1, 3, 8, 16>}]} {
    %c0 = arith.constant 0 : index
    %c0_0 = arith.constant 0 : index
    %c0_1 = arith.constant 0 : index
    %c0_2 = arith.constant 0 : index
    %0 = vector.load %arg1[%c0, %c0_0, %c0_1, %c0_2] : memref<1x3x8x16xf32, #tpu.memory_space<vmem>>, vector<1x3x8x16xf32>
    %c0_3 = arith.constant 0 : index
    %c0_4 = arith.constant 0 : index
    %c0_5 = arith.constant 0 : index
    %c0_6 = arith.constant 0 : index
    %1 = vector.load %arg2[%c0_3, %c0_4, %c0_5, %c0_6] : memref<1x3x8x16xf32, #tpu.memory_space<vmem>>, vector<1x3x8x16xf32>
    %2 = arith.addf %0, %1 : vector<1x3x8x16xf32>
    %c0_7 = arith.constant 0 : index
    %c0_8 = arith.constant 0 : index
    %c0_9 = arith.constant 0 : index
    %c0_10 = arith.constant 0 : index
    %3 = vector.load %arg3[%c0_7, %c0_8, %c0_9, %c0_10] : memref<1x3x8x16xf32, #tpu.memory_space<vmem>>, vector<1x3x8x16xf32>
    tpu.vector_store %arg3[%c0_7, %c0_8, %c0_9, %c0_10], %2 {strides = array<i32>} : memref<1x3x8x16xf32, #tpu.memory_space<vmem>>, vector<1x3x8x16xf32>,
    return
  }
  func.func @transform_0(%arg0: i32) -> (i32, i32, i32, i32) {
    %c0_i32 = arith.constant 0 : i32
    %c0_i32_0 = arith.constant 0 : i32
    %c0_i32_1 = arith.constant 0 : i32
    %c0_i32_2 = arith.constant 0 : i32
    return %arg0, %c0_i32, %c0_i32_0, %c0_i32_1 : i32, i32, i32, i32
  }
  func.func @transform_1(%arg0: i32) -> (i32, i32, i32, i32) {
    %c0_i32 = arith.constant 0 : i32
    %c0_i32_0 = arith.constant 0 : i32
    %c0_i32_1 = arith.constant 0 : i32
    %c0_i32_2 = arith.constant 0 : i32
    %c0_i32_3 = arith.constant 0 : i32
    return %c0_i32, %c0_i32_0, %c0_i32_1, %c0_i32_2 : i32, i32, i32, i32
  }
  func.func @transform_2(%arg0: i32) -> (i32, i32, i32, i32) {
    %c0_i32 = arith.constant 0 : i32
    %c0_i32_0 = arith.constant 0 : i32
    %c0_i32_1 = arith.constant 0 : i32
    %c0_i32_2 = arith.constant 0 : i32
    return %arg0, %c0_i32, %c0_i32_0, %c0_i32_1 : i32, i32, i32, i32
  }
}

</mosaic_0001>

<llo_original>
// kernel: fixed_patch_prompter.1
$region0: #{fixed_patch_prompter.1}
  #allocation0 [shape = 'u32[]', space=smem, size = 0x4, offset = 0x4, fixed_abs, tag = 'smem constant byte address 0x4 - core index']
  #allocation1 [shape = 'u32[144,128]{1,0:T(1,128)}', space=vmem, size = 0x12000, scoped, tag = 'internal scratch']
  %s0 = inlined_call_operand.hbm [shape: f32[2,3,16,16], index: 0, kind: input, shape index: {}, may-alias: {0,2}]
  %s1 = inlined_call_operand.vmem [shape: f32[1,3,8,16], index: 1, kind: input, shape index: {}]
  %s2 = inlined_call_operand.hbm [shape: f32[2,3,16,16], index: 2, kind: output, shape index: {}, may-alias: {0,2}]
  %s3 = sld [smem:[#allocation0]]
  $region45: #{fixed_patch_prompter.1} parent=0
    _
  %s5 = ssub.s32 1, %s3
  %s6 = scalar_select 0, %s5, %s3
  $region1: #{fixed_patch_prompter.1} parent=0
    #allocation2 [shape = 'u8[24576]{0}', space=vmem, size = 0x6000, scoped, tag = 'input window, operand 0']
    #allocation3 [shape = 's32[2]{0}', space=sflag, size = 0x8, scoped, tag = 'scoped memory for fixed_patch_prompter.1']
    #allocation4 [shape = 's32[2]{0}', space=sflag, size = 0x8, scoped, tag = 'scoped memory for fixed_patch_prompter.1']
    #allocation5 [shape = 'u8[24576]{0}', space=vmem, size = 0x6000, scoped, tag = 'output window, operand 0']
    %7 = vsyncpa [#allocation3], 0
    %s8 = scalar_lea.sflag [#allocation3], 1
    %9 = vsyncpa %s8, 0
    %10 = vsyncpa [#allocation4], 0
    %s11 = scalar_lea.sflag [#allocation4], 1
    %12 = vsyncpa %s11, 0
    loop: start=0, step=1, limit=4
    $region2: #{fixed_patch_prompter.1} parent=1 // loop_pre_header
      _
    $region3: #{fixed_patch_prompter.1} parent=1 // loop_header
      %s14 = sphi 0, %s18
      %p15 = scmp.ge.s32.totalorder %s14, 4
      %s24 = sphi 0, %s26
      %s27 = sphi 0, %s24
      %s28 = sphi 0, %s27
      %s44 = sphi 0, %s28
      %s48 = sphi 0, %s48
      %s50 = sphi 0, %s48
      %s51 = sphi 0, %s50
      %s65 = sphi 0, %s51
      %s71 = sphi 0, %s73
      %s74 = sphi 0, %s71
      %s75 = sphi 0, %s74
      %s91 = sphi 0, %s75
    $region4: #{fixed_patch_prompter.1} parent=1 // loop_header_branch
      %17 = sbr.rel (%p15) target = $region8
    $region5: #{fixed_patch_prompter.1} parent=1 // loop_body
      %s19 = ssub.s32 %s14, 1
      %s20 = ssub.s32 %s14, 2
      %s21 = sadd.s32 %s14, 1
      %s22 = ssub.s32 %s14, %s21
      %p23 = scmp.eq.s32.totalorder %s22, 0
      %s25 = sadd.s32 %s24, 1
      %s26 = scalar_select %p23, %s24, %s25
      %p29 = pneg %p23
      %p30 = scmp.eq.s32.totalorder %s14, 1
      %p31 = por %p29, %p30
      %p32 = scmp.ne.s32.totalorder %s24, %s27
      %p33 = scmp.eq.s32.totalorder %s14, 0
      %p34 = por %p32, %p33
      %p35 = scmp.ne.s32.totalorder %s24, %s27
      %p36 = scmp.eq.s32.totalorder %s19, 1
      %p37 = por %p35, %p36
      %p38 = scmp.ne.s32.totalorder %s27, %s28
      %p39 = scmp.eq.s32.totalorder %s19, 0
      %p40 = por %p38, %p39
      %p41 = scmp.ne.s32.totalorder %s27, %s28
      %p42 = scmp.eq.s32.totalorder %s20, 1
      %p43 = por %p41, %p42
      %p45 = scmp.ne.s32.totalorder %s28, %s44
      %p46 = scmp.eq.s32.totalorder %s20, 0
      %p47 = por %p45, %p46
      %s49 = sadd.s32 %s48, 1
      %p52 = scmp.eq.s32.totalorder %s14, 1
      %p53 = scmp.ne.s32.totalorder %s48, %s50
      %p54 = scmp.eq.s32.totalorder %s14, 0
      %p55 = por %p53, %p54
      %p56 = scmp.ne.s32.totalorder %s48, %s50
      %p57 = scmp.eq.s32.totalorder %s19, 1
      %p58 = por %p56, %p57
      %p59 = scmp.ne.s32.totalorder %s50, %s51
      %p60 = scmp.eq.s32.totalorder %s19, 0
      %p61 = por %p59, %p60
      %p62 = scmp.ne.s32.totalorder %s50, %s51
      %p63 = scmp.eq.s32.totalorder %s20, 1
      %p64 = por %p62, %p63
      %p66 = scmp.ne.s32.totalorder %s51, %s65
      %p67 = scmp.eq.s32.totalorder %s20, 0
      %p68 = por %p66, %p67
      %s69 = ssub.s32 %s14, %s21
      %p70 = scmp.eq.s32.totalorder %s69, 0
      %s72 = sadd.s32 %s71, 1
      %s73 = scalar_select %p70, %s71, %s72
      %p76 = pneg %p70
      %p77 = scmp.eq.s32.totalorder %s14, 1
      %p78 = por %p76, %p77
      %p79 = scmp.ne.s32.totalorder %s71, %s74
      %p80 = scmp.eq.s32.totalorder %s14, 0
      %p81 = por %p79, %p80
      %p82 = scmp.ne.s32.totalorder %s71, %s74
      %p83 = scmp.eq.s32.totalorder %s19, 1
      %p84 = por %p82, %p83
      %p85 = scmp.ne.s32.totalorder %s74, %s75
      %p86 = scmp.eq.s32.totalorder %s19, 0
      %p87 = por %p85, %p86
      %p88 = scmp.ne.s32.totalorder %s74, %s75
      %p89 = scmp.eq.s32.totalorder %s20, 1
      %p90 = por %p88, %p89
      %p92 = scmp.ne.s32.totalorder %s75, %s91
      %p93 = scmp.eq.s32.totalorder %s20, 0
      %p94 = por %p92, %p93
      %p95 = scmp.le.s32.totalorder 1, %s14
      %p96 = scmp.lt.s32.totalorder %s14, 3
      %p97 = pnand %p95, %p96
      %p98 = pneg %p97
      // Predicated region
      $region9: #{fixed_patch_prompter.1} parent=5 // pred_check
        _
      $region10: #{fixed_patch_prompter.1} parent=5 // pred_check_branch
        %100 = sbr.rel (%p97) target = $region12
      $region11: #{fixed_patch_prompter.1} parent=5 // pred_region
        %s101 = ssub.s32 %s14, 1
        // Predicated region
        $region13: #{fixed_patch_prompter.1} parent=11 // pred_check
          %p102 = pneg %p61
        $region14: #{fixed_patch_prompter.1} parent=11 // pred_check_branch
          %104 = sbr.rel (%p102) target = $region16
        $region15: #{fixed_patch_prompter.1} parent=11 // pred_region
          _
        $region16: #{fixed_patch_prompter.1} parent=11 // pred_fallthru
          _
      $region12: #{fixed_patch_prompter.1} parent=5 // pred_fallthru
        _
      %p105 = scmp.lt.s32.totalorder %s14, 2
      // Predicated region
      $region17: #{fixed_patch_prompter.1} parent=5 // pred_check
        %p106 = pneg %p105
      $region18: #{fixed_patch_prompter.1} parent=5 // pred_check_branch
        %108 = sbr.rel (%p106) target = $region20
      $region19: #{fixed_patch_prompter.1} parent=5 // pred_region
        // Predicated region
        $region21: #{fixed_patch_prompter.1} parent=19 // pred_check
          %p109 = pneg %p34
        $region22: #{fixed_patch_prompter.1} parent=19 // pred_check_branch
          %111 = sbr.rel (%p109) target = $region24
        $region23: #{fixed_patch_prompter.1} parent=19 // pred_region
          %s112 = sand.u32 %s24, 1
          %s113 = scalar_lea.sflag [#allocation3], %s112
          %s114 = sand.u32 %s24, 1
          %s115 = smul.addr %s114, 24
          %s116 = scalar_lea.vmem [#allocation2], %s115
          %s118 = ssub.s32 384, 384
          %119 = vsyncadd %s113, %s118
          %s120 = smul.addr %s14, 6
          %s121 = smul.addr %s120, 128
          %s122 = scalar_lea.hbm %s0, %s121
          %s123 = sshll.u32 %s116, 4
          %s124 = int_to_ptr.vmem [resolvable:$true] %s123
          %129 = dma.hbm_to_vmem [thread:$0]  %s122, 384, %s124, %s113, 256, 128, 8
        $region24: #{fixed_patch_prompter.1} parent=19 // pred_fallthru
          _
      $region20: #{fixed_patch_prompter.1} parent=5 // pred_fallthru
        _
      %p130 = scmp.le.s32.totalorder 1, %s14
      %p131 = scmp.lt.s32.totalorder %s14, 3
      %p132 = pnand %p130, %p131
      %p133 = pneg %p132
      // Predicated region
      $region25: #{fixed_patch_prompter.1} parent=5 // pred_check
        _
      $region26: #{fixed_patch_prompter.1} parent=5 // pred_check_branch
        %135 = sbr.rel (%p132) target = $region28
      $region27: #{fixed_patch_prompter.1} parent=5 // pred_region
        %s136 = ssub.s32 %s14, 1
        %s137 = sand.u32 %s27, 1
        %s138 = scalar_lea.sflag [#allocation3], %s137
        %s139 = sand.u32 %s27, 1
        %s140 = smul.addr %s139, 24
        %s141 = scalar_lea.vmem [#allocation2], %s140
        // Predicated region
        $region29: #{fixed_patch_prompter.1} parent=27 // pred_check
          %p142 = pneg %p40
        $region30: #{fixed_patch_prompter.1} parent=27 // pred_check_branch
          %144 = sbr.rel (%p142) target = $region32
        $region31: #{fixed_patch_prompter.1} parent=27 // pred_region
          %145 = dma.done %s138, 384
        $region32: #{fixed_patch_prompter.1} parent=27 // pred_fallthru
          _
        %s146 = sand.u32 %s27, 1
        %s147 = scalar_lea.sflag [#allocation3], %s146
        %s148 = sand.u32 %s27, 1
        %s149 = smul.addr %s148, 24
        %s150 = scalar_lea.vmem [#allocation2], %s149
        %p151 = pneg %p40
        %p152 = pneg %p37
        %p153 = pneg %p61
        %p154 = pneg %p58
        %p155 = pneg %p87
        %p156 = pneg %p84
        %s157 = sand.u32 %s74, 1
        %s158 = scalar_lea.sflag [#allocation4], %s157
        %s159 = sand.u32 %s74, 1
        %s160 = smul.addr %s159, 24
        %s161 = scalar_lea.vmem [#allocation5], %s160
        %v162 = vld [vmem:[%s141] sm:$0xff]
        %v163 = vld [vmem:[%s141 + $0x8] sm:$0xff]
        %v164 = vld [vmem:[%s141 + $0x10] sm:$0xff]
        %v165 = vld [vmem:[%s1] sm:$0xff]
        %v166 = vld [vmem:[%s1 + $0x8] sm:$0xff]
        %v167 = vld [vmem:[%s1 + $0x10] sm:$0xff]
        %v168 = vadd.f32 %v162, %v165
        %v169 = vadd.f32 %v163, %v166
        %v170 = vadd.f32 %v164, %v167
        %vm171 = vcmask 130048
        %172 = vst.msk [vmem:[%s161] sm:$0xff] %vm171, %v168
        %173 = vst.msk [vmem:[%s161 + $0x8] sm:$0xff] %vm171, %v169
        %174 = vst.msk [vmem:[%s161 + $0x10] sm:$0xff] %vm171, %v170
        %s175 = sand.u32 %s74, 1
        %s176 = scalar_lea.sflag [#allocation4], %s175
        %s177 = sand.u32 %s74, 1
        %s178 = smul.addr %s177, 24
        %s179 = scalar_lea.vmem [#allocation5], %s178
        // Predicated region
        $region33: #{fixed_patch_prompter.1} parent=27 // pred_check
          %p180 = pneg %p84
        $region34: #{fixed_patch_prompter.1} parent=27 // pred_check_branch
          %182 = sbr.rel (%p180) target = $region36
        $region35: #{fixed_patch_prompter.1} parent=27 // pred_region
          %s184 = ssub.s32 384, 384
          %185 = vsyncadd %s176, %s184
          %s186 = smul.addr %s19, 6
          %s187 = smul.addr %s186, 128
          %s188 = scalar_lea.hbm %s2, %s187
          %s189 = sshll.u32 %s179, 4
          %s190 = int_to_ptr.vmem [resolvable:$true] %s189
          %195 = dma.vmem_to_hbm [thread:$0]  %s190, 384, %s188, %s176, 128, 256, 8
        $region36: #{fixed_patch_prompter.1} parent=27 // pred_fallthru
          _
      $region28: #{fixed_patch_prompter.1} parent=5 // pred_fallthru
        _
      %p196 = scmp.le.s32.totalorder 2, %s14
      // Predicated region
      $region37: #{fixed_patch_prompter.1} parent=5 // pred_check
        %p197 = pneg %p196
      $region38: #{fixed_patch_prompter.1} parent=5 // pred_check_branch
        %199 = sbr.rel (%p197) target = $region40
      $region39: #{fixed_patch_prompter.1} parent=5 // pred_region
        %s200 = ssub.s32 %s14, 2
        // Predicated region
        $region41: #{fixed_patch_prompter.1} parent=39 // pred_check
          %p201 = pneg %p90
        $region42: #{fixed_patch_prompter.1} parent=39 // pred_check_branch
          %203 = sbr.rel (%p201) target = $region44
        $region43: #{fixed_patch_prompter.1} parent=39 // pred_region
          %s204 = sand.u32 %s75, 1
          %s205 = scalar_lea.sflag [#allocation4], %s204
          %s206 = sand.u32 %s75, 1
          %s207 = smul.addr %s206, 24
          %s208 = scalar_lea.vmem [#allocation5], %s207
          %209 = dma.done %s205, 384
        $region44: #{fixed_patch_prompter.1} parent=39 // pred_fallthru
          _
      $region40: #{fixed_patch_prompter.1} parent=5 // pred_fallthru
        _
    $region6: #{fixed_patch_prompter.1} parent=1 // loop_footer
      %s18 = sadd.s32 1, %s14
    $region7: #{fixed_patch_prompter.1} parent=1 // loop_footer_branch
      %13 = sbr.rel target = $region3
    $region8: #{fixed_patch_prompter.1} parent=1 // loop_exit
      _
    %210 = vsyncpa [#allocation3], 1
    %s211 = scalar_lea.sflag [#allocation3], 1
    %212 = vsyncpa %s211, 1
    %213 = vsyncpa [#allocation4], 1
    %s214 = scalar_lea.sflag [#allocation4], 1
    %215 = vsyncpa %s214, 1

</llo_original>
